<compile_context>
chip_gen: v7x
topology: tpu7x:2x2x1
jax: 0.10.0
libtpu: 0.0.40
codegen_flags: <defaults>
</compile_context>

<pallas_src>
import functools

import jax
import jax.numpy as jnp
from jax import lax
from jax.experimental import pallas as pl
from jax.experimental.pallas import tpu as pltpu


_LEAKY_SLOPE = 0.2

# Whether pl.Buffered(1) (single-buffered resident weights) is accepted by this
# jax/libtpu build.  Flipped to False on the first lowering failure.
_SINGLE_BUFFER_WEIGHTS = [True]


def _round_up(n, m):
    return ((n + m - 1) // m) * m


def _vmem_capacity_bytes():
    """Generation-aware physical VMEM size (128 MiB v5e/v6e, 64 MiB per TC on v7x)."""
    try:
        cap = getattr(pltpu.get_tpu_info(), "vmem_capacity_bytes", None)
        if cap:
            return int(cap)
    except Exception:
        pass
    return 64 << 20  # conservative default (v7x per-core size)


# ----------------------------------------------------------------------------------- #
# Kernels
# ----------------------------------------------------------------------------------- #
def _fused_kernel(x_ref, w1_ref, b1_ref, w2_ref, b2_ref, o_ref, *, op_dtype):
    # One batch tile; both weight matrices are VMEM-resident (constant index_map).
    x = x_ref[...].astype(op_dtype)                 # optional cast happens in-kernel
    h = jnp.dot(x, w1_ref[...], preferred_element_type=jnp.float32) + b1_ref[...]
    h = jnp.maximum(h, _LEAKY_SLOPE * h)            # LeakyReLU(0.2): mul + max on VPU
    y = jnp.dot(h.astype(op_dtype), w2_ref[...],
                preferred_element_type=jnp.float32) + b2_ref[...]
    o_ref[...] = y.astype(o_ref.dtype)


def _ktiled_kernel(x_ref, w1_ref, b1_ref, w2_ref, b2_ref, o_ref, acc_ref, *,
                   op_dtype, d_in, tk):
    # K-tiled first matmul: used only when w1 is too large to stay VMEM-resident.
    k = pl.program_id(1)

    @pl.when(k == 0)
    def _():
        acc_ref[...] = jnp.zeros_like(acc_ref)

    x = x_ref[...].astype(op_dtype)
    w1 = w1_ref[...]
    if d_in % tk:
        # Ragged final K block: zero the out-of-bounds x columns AND w1 rows so
        # uninitialized (possibly NaN/Inf) padding can never reach the accumulator.
        limit = d_in - k * tk
        cols = lax.broadcasted_iota(jnp.int32, x.shape, 1)
        x = jnp.where(cols < limit, x, jnp.zeros_like(x))
        rows = lax.broadcasted_iota(jnp.int32, w1.shape, 0)
        w1 = jnp.where(rows < limit, w1, jnp.zeros_like(w1))

    acc_ref[...] += jnp.dot(x, w1, preferred_element_type=jnp.float32)

    @pl.when(k == pl.num_programs(1) - 1)
    def _():
        h = acc_ref[...] + b1_ref[...]
        h = jnp.maximum(h, _LEAKY_SLOPE * h)
        y = jnp.dot(h.astype(op_dtype), w2_ref[...],
                    preferred_element_type=jnp.float32) + b2_ref[...]
        o_ref[...] = y.astype(o_ref.dtype)


# ----------------------------------------------------------------------------------- #
# Wrapper
# ----------------------------------------------------------------------------------- #
def domain_discriminator_forward(x, w1, b1, w2, b2, *, block_b=4096,
                                 compute_dtype=None, k_tile=None):
    """Forward pass of domain_discriminator: Linear -> LeakyReLU(0.2) -> Linear.

    x: [B, D_in]; w1: [D_in, D_out]; b1: [D_out]; w2: [D_out, D_out]; b2: [D_out].
    Weights are stored transposed vs PyTorch ([in, out]) so the kernel computes x@W+b.

    compute_dtype: MXU operand dtype.  None (default) keeps the input dtype; pass
      jnp.bfloat16 explicitly to trade a small amount of precision for MXU throughput.
    k_tile: force the K-tiled (reduction over D_in) path with this tile size.  Normally
      it is selected automatically only when the weights do not fit the VMEM budget.
    """
    B, d_in = x.shape
    d_out = w1.shape[1]
    out_dtype = x.dtype
    op_dtype = jnp.dtype(compute_dtype) if compute_dtype is not None else jnp.dtype(x.dtype)
    op_size = op_dtype.itemsize
    x_size = jnp.dtype(x.dtype).itemsize
    out_size = jnp.dtype(out_dtype).itemsize

    # Generation-aware VMEM budget.
    vmem_cap = _vmem_capacity_bytes()
    working_budget = (vmem_cap * 3) // 4      # ~96 MiB on v5e/v6e, ~48 MiB on v7x
    vmem_limit = (vmem_cap * 7) // 8          # ~112 MiB on v5e/v6e, ~56 MiB on v7x

    # Only the tiny weight/bias arrays get touched in the wrapper; x is passed through
    # untouched (no pad / cast / slice passes over the big streaming arrays).
    w1 = w1.astype(op_dtype)
    w2 = w2.astype(op_dtype)
    b1 = b1.reshape(1, d_out).astype(jnp.float32)
    b2 = b2.reshape(1, d_out).astype(jnp.float32)

    cast_bytes = d_in * op_size if op_dtype != x.dtype else 0

    def fused_footprint(tb_):
        # Conservative: weights counted double-buffered (matches the fallback path).
        w_bytes = 2 * ((d_in * d_out + d_out * d_out) * op_size + 2 * d_out * 4)
        s_bytes = tb_ * (2 * d_in * x_size + cast_bytes
                         + 2 * d_out * out_size + 2 * d_out * 4)
        return w_bytes + s_bytes

    # ---- batch tile selection --------------------------------------------------------
    if B <= 256:
        tb = min(B, max(16, _round_up(block_b, 16)))          # tb == B is always legal
    else:
        # Waste-aware, multiples of 256, and >= 2 tiles when B >= 512 so a 2-TC chip
        # (v7x) can split the "parallel" batch axis.
        n_tiles = max(pl.cdiv(B, block_b), 2 if B >= 512 else 1)
        tb = _round_up(pl.cdiv(B, n_tiles), 256)
        if tb > B:
            tb = B
        while tb > 256 and fused_footprint(tb) > working_budget:
            tb = max(256, _round_up(tb // 2, 256))

    use_ktile = (k_tile is not None) or fused_footprint(tb) > working_budget

    flops = 2 * B * d_in * d_out + 2 * B * d_out * d_out
    bytes_accessed = (B * d_in * x_size + (d_in + d_out) * d_out * op_size
                      + 2 * d_out * 4 + B * d_out * out_size)
    cost = pl.CostEstimate(flops=flops, transcendentals=0,
                           bytes_accessed=int(bytes_accessed))

    # ---- path A: weights fully VMEM-resident, 1-D batch grid --------------------------
    if not use_ktile:
        kernel = functools.partial(_fused_kernel, op_dtype=op_dtype)
        grid = (pl.cdiv(B, tb),)

        def run(weight_mode):
            def wspec(shape):
                if weight_mode is None:
                    return pl.BlockSpec(shape, lambda i: (0, 0))
                return pl.BlockSpec(shape, lambda i: (0, 0), pipeline_mode=weight_mode)

            return pl.pallas_call(
                kernel,
                out_shape=jax.ShapeDtypeStruct((B, d_out), out_dtype),
                grid=grid,
                in_specs=[
                    pl.BlockSpec((tb, d_in), lambda i: (i, 0)),   # x: streamed/pipelined
                    wspec((d_in, d_out)),                         # w1: resident
                    wspec((1, d_out)),                            # b1
                    wspec((d_out, d_out)),                        # w2: resident
                    wspec((1, d_out)),                            # b2
                ],
                out_specs=pl.BlockSpec((tb, d_out), lambda i: (i, 0)),
                compiler_params=pltpu.CompilerParams(
                    dimension_semantics=("parallel",),
                    vmem_limit_bytes=int(vmem_limit)),
                cost_estimate=cost,
            )(x, w1, b1, w2, b2)

        if _SINGLE_BUFFER_WEIGHTS[0]:
            try:
                # Constant-index weight blocks are fetched once; single-buffering halves
                # their VMEM footprint, leaving more room for the streaming batch tiles.
                return run(pl.Buffered(1))
            except Exception:
                _SINGLE_BUFFER_WEIGHTS[0] = False
        return run(None)

    # ---- path B: K-tiled first matmul (w1 streamed over the reduction axis) -----------
    if B > 256:
        tb = min(tb, 512)   # modest batch tile; pipeline depth comes from streaming K

    def ktiled_footprint(tb_, tk_):
        w_bytes = (2 * tk_ * d_out * op_size          # w1 block, double-buffered
                   + 2 * d_out * d_out * op_size      # w2 resident (counted x2)
                   + 4 * d_out * 4)
        s_bytes = tb_ * (2 * tk_ * x_size + (tk_ * op_size if op_dtype != x.dtype else 0)
                         + 2 * d_out * out_size
                         + d_out * 4                  # f32 accumulator scratch
                         + 2 * d_out * 4)
        return w_bytes + s_bytes

    if k_tile is not None:
        tk = max(128, _round_up(min(k_tile, d_in), 128))
    else:
        tk = _round_up(d_in, 128)
        while tk > 128 and ktiled_footprint(tb, tk) > working_budget:
            tk = max(128, _round_up(tk // 2, 128))
        while tb > 256 and ktiled_footprint(tb, tk) > working_budget:
            tb = max(256, _round_up(tb // 2, 256))
        # TODO(synk): if w2 (d_out x d_out) alone exceeds VMEM, the second matmul would
        # additionally need N-tiling; not implemented.

    nk = pl.cdiv(d_in, tk)
    kernel = functools.partial(_ktiled_kernel, op_dtype=op_dtype, d_in=d_in, tk=tk)

    def run_k(weight_mode):
        def wspec(shape):
            if weight_mode is None:
                return pl.BlockSpec(shape, lambda i, k: (0, 0))
            return pl.BlockSpec(shape, lambda i, k: (0, 0), pipeline_mode=weight_mode)

        return pl.pallas_call(
            kernel,
            out_shape=jax.ShapeDtypeStruct((B, d_out), out_dtype),
            grid=(pl.cdiv(B, tb), nk),
            in_specs=[
                pl.BlockSpec((tb, tk), lambda i, k: (i, k)),      # x: batch x K tiles
                pl.BlockSpec((tk, d_out), lambda i, k: (k, 0)),   # w1: streamed over K
                wspec((1, d_out)),                                # b1 resident
                wspec((d_out, d_out)),                            # w2 resident
                wspec((1, d_out)),                                # b2 resident
            ],
            out_specs=pl.BlockSpec((tb, d_out), lambda i, k: (i, 0)),
            scratch_shapes=[pltpu.VMEM((tb, d_out), jnp.float32)],
            compiler_params=pltpu.CompilerParams(
                dimension_semantics=("parallel", "arbitrary"),
                vmem_limit_bytes=int(vmem_limit)),
            cost_estimate=cost,
        )(x, w1, b1, w2, b2)

    if _SINGLE_BUFFER_WEIGHTS[0]:
        try:
            return run_k(pl.Buffered(1))
        except Exception:
            _SINGLE_BUFFER_WEIGHTS[0] = False
    return run_k(None)


# ----------------------------------------------------------------------------------- #
# Parameter init matching weights_init() in the PyTorch module
# ----------------------------------------------------------------------------------- #
def _xavier_uniform(key, fan_in, fan_out, gain=0.5, dtype=jnp.float32):
    # torch.nn.init.xavier_uniform_: U(-a, a), a = gain * sqrt(6 / (fan_in + fan_out))
    bound = gain * (6.0 / (fan_in + fan_out)) ** 0.5
    # Stored as [in, out] (transpose of PyTorch's [out, in]) so the kernel does x @ W.
    return jax.random.uniform(key, (fan_in, fan_out), dtype=dtype,
                              minval=-bound, maxval=bound)


def init_params(key, input_dim, output_dim, dtype=jnp.float32):
    k1, k2 = jax.random.split(key)
    w1 = _xavier_uniform(k1, input_dim, output_dim, dtype=dtype)
    b1 = jnp.zeros((output_dim,), dtype=dtype)       # weights_init: bias.fill_(0)
    w2 = _xavier_uniform(k2, output_dim, output_dim, dtype=dtype)
    b2 = jnp.zeros((output_dim,), dtype=dtype)
    return w1, b1, w2, b2


if __name__ == "__main__":
    key = jax.random.PRNGKey(0)
    kx, kp, kx2, kp2 = jax.random.split(key, 4)

    def reference(x, w1, b1, w2, b2):
        h = x @ w1 + b1
        h = jnp.where(h > 0, h, 0.2 * h)
        return h @ w2 + b2

    # Small shapes consistent with the module (hiden_size is unused in forward()).
    B, input_dim, output_dim = 50, 32, 32
    x = jax.random.normal(kx, (B, input_dim), dtype=jnp.float32)
    w1, b1, w2, b2 = init_params(kp, input_dim, output_dim)
    y_ref = reference(x, w1, b1, w2, b2)

    # 1) Default path: f32 operands, single fused batch tile, weights VMEM-resident.
    y = jax.block_until_ready(domain_discriminator_forward(x, w1, b1, w2, b2))
    assert y.shape == (B, output_dim) and y.dtype == x.dtype
    assert jnp.allclose(y, y_ref, atol=1e-5, rtol=1e-5)

    # 2) Multi-tile batch pipeline with a ragged last tile (block_b forces tb=16).
    y = jax.block_until_ready(
        domain_discriminator_forward(x, w1, b1, w2, b2, block_b=16))
    assert jnp.allclose(y, y_ref, atol=1e-5, rtol=1e-5)

    # 3) Explicit bf16 MXU-operand path (f32 accumulation) — looser tolerance.
    y = jax.block_until_ready(
        domain_discriminator_forward(x, w1, b1, w2, b2, compute_dtype=jnp.bfloat16))
    assert jnp.allclose(y, y_ref, atol=5e-2, rtol=5e-2)

    # 4) K-tiled fallback path (forced), including a ragged reduction dimension.
    B2, d_in2, d_out2 = 64, 200, 32
    x2 = jax.random.normal(kx2, (B2, d_in2), dtype=jnp.float32)
    w1b, b1b, w2b, b2b = init_params(kp2, d_in2, d_out2)
    y2_ref = reference(x2, w1b, b1b, w2b, b2b)
    y2 = jax.block_until_ready(
        domain_discriminator_forward(x2, w1b, b1b, w2b, b2b, k_tile=128))
    assert y2.shape == (B2, d_out2)
    assert jnp.allclose(y2, y2_ref, atol=1e-4, rtol=1e-4)

    print("KERNEL_OK")
</pallas_src>

<mosaic_0001>
module attributes {stable_mosaic.version = 11 : i64} {
  func.func @_fused_kernel(%arg0: i32, %arg1: memref<50x32xf32, #tpu.memory_space<vmem>>, %arg2: memref<32x32xf32, #tpu.memory_space<vmem>>, %arg3: memref<1x32xf32, #tpu.memory_space<vmem>>, %arg4: memref<32x32xf32, #tpu.memory_space<vmem>>, %arg5: memref<1x32xf32, #tpu.memory_space<vmem>>, %arg6: memref<50x32xf32, #tpu.memory_space<vmem>>) attributes {dimension_semantics = [#tpu.dimension_semantics<parallel>], iteration_bounds = array<i64: 1>, scalar_prefetch = 0 : i64, scratch_operands = 0 : i64, tpu.core_type = #tpu.core_type<tc>, window_params = [{transform_indices = @transform_0, window_bounds = array<i64: 50, 32>}, {pipeline_mode = #tpu.pipeline_mode<synchronous>, transform_indices = @transform_1, window_bounds = array<i64: 32, 32>}, {pipeline_mode = #tpu.pipeline_mode<synchronous>, transform_indices = @transform_2, window_bounds = array<i64: 1, 32>}, {pipeline_mode = #tpu.pipeline_mode<synchronous>, transform_indices = @transform_3, window_bounds = array<i64: 32, 32>}, {pipeline_mode = #tpu.pipeline_mode<synchronous>, transform_indices = @transform_4, window_bounds = array<i64: 1, 32>}, {transform_indices = @transform_5, window_bounds = array<i64: 50, 32>}]} {
    %c0 = arith.constant 0 : index
    %c0_0 = arith.constant 0 : index
    %0 = vector.load %arg1[%c0, %c0_0] : memref<50x32xf32, #tpu.memory_space<vmem>>, vector<50x32xf32>
    %c0_1 = arith.constant 0 : index
    %c0_2 = arith.constant 0 : index
    %1 = vector.load %arg2[%c0_1, %c0_2] : memref<32x32xf32, #tpu.memory_space<vmem>>, vector<32x32xf32>
    %cst = arith.constant dense<0.000000e+00> : vector<50x32xf32>
    %2 = tpu.matmul %0, %1, %cst {dimension_numbers = #tpu.dot_dimension_numbers<[1], [0], [0], [1], [0, 0, 1, 1], [], []>} : vector<50x32xf32>, vector<32x32xf32>, vector<50x32xf32> -> vector<50x32xf32>
    %c0_3 = arith.constant 0 : index
    %c0_4 = arith.constant 0 : index
    %3 = vector.load %arg3[%c0_3, %c0_4] : memref<1x32xf32, #tpu.memory_space<vmem>>, vector<1x32xf32>
    %4 = vector.broadcast %3 : vector<1x32xf32> to vector<50x32xf32>
    %5 = arith.addf %2, %4 : vector<50x32xf32>
    %cst_5 = arith.constant 2.000000e-01 : f32
    %6 = vector.broadcast %cst_5 : f32 to vector<50x32xf32>
    %7 = arith.mulf %6, %5 : vector<50x32xf32>
    %8 = arith.maximumf %5, %7 : vector<50x32xf32>
    %c0_6 = arith.constant 0 : index
    %c0_7 = arith.constant 0 : index
    %9 = vector.load %arg4[%c0_6, %c0_7] : memref<32x32xf32, #tpu.memory_space<vmem>>, vector<32x32xf32>
    %cst_8 = arith.constant dense<0.000000e+00> : vector<50x32xf32>
    %10 = tpu.matmul %8, %9, %cst_8 {dimension_numbers = #tpu.dot_dimension_numbers<[1], [0], [0], [1], [0, 0, 1, 1], [], []>} : vector<50x32xf32>, vector<32x32xf32>, vector<50x32xf32> -> vector<50x32xf32>
    %c0_9 = arith.constant 0 : index
    %c0_10 = arith.constant 0 : index
    %11 = vector.load %arg5[%c0_9, %c0_10] : memref<1x32xf32, #tpu.memory_space<vmem>>, vector<1x32xf32>
    %12 = vector.broadcast %11 : vector<1x32xf32> to vector<50x32xf32>
    %13 = arith.addf %10, %12 : vector<50x32xf32>
    %c0_11 = arith.constant 0 : index
    %c0_12 = arith.constant 0 : index
    %14 = vector.load %arg6[%c0_11, %c0_12] : memref<50x32xf32, #tpu.memory_space<vmem>>, vector<50x32xf32>
    tpu.vector_store %arg6[%c0_11, %c0_12], %13 {strides = array<i32>} : memref<50x32xf32, #tpu.memory_space<vmem>>, vector<50x32xf32>,
    return
  }
  func.func @transform_0(%arg0: i32) -> (i32, i32) {
    %c0_i32 = arith.constant 0 : i32
    %c0_i32_0 = arith.constant 0 : i32
    return %arg0, %c0_i32 : i32, i32
  }
  func.func @transform_1(%arg0: i32) -> (i32, i32) {
    %c0_i32 = arith.constant 0 : i32
    %c0_i32_0 = arith.constant 0 : i32
    %c0_i32_1 = arith.constant 0 : i32
    return %c0_i32, %c0_i32_0 : i32, i32
  }
  func.func @transform_2(%arg0: i32) -> (i32, i32) {
    %c0_i32 = arith.constant 0 : i32
    %c0_i32_0 = arith.constant 0 : i32
    %c0_i32_1 = arith.constant 0 : i32
    return %c0_i32, %c0_i32_0 : i32, i32
  }
  func.func @transform_3(%arg0: i32) -> (i32, i32) {
    %c0_i32 = arith.constant 0 : i32
    %c0_i32_0 = arith.constant 0 : i32
    %c0_i32_1 = arith.constant 0 : i32
    return %c0_i32, %c0_i32_0 : i32, i32
  }
  func.func @transform_4(%arg0: i32) -> (i32, i32) {
    %c0_i32 = arith.constant 0 : i32
    %c0_i32_0 = arith.constant 0 : i32
    %c0_i32_1 = arith.constant 0 : i32
    return %c0_i32, %c0_i32_0 : i32, i32
  }
  func.func @transform_5(%arg0: i32) -> (i32, i32) {
    %c0_i32 = arith.constant 0 : i32
    %c0_i32_0 = arith.constant 0 : i32
    return %arg0, %c0_i32 : i32, i32
  }
}

module attributes {stable_mosaic.version = 11 : i64} {
  func.func @_fused_kernel(%arg0: i32, %arg1: memref<50x32xf32, #tpu.memory_space<vmem>>, %arg2: memref<32x32xf32, #tpu.memory_space<vmem>>, %arg3: memref<1x32xf32, #tpu.memory_space<vmem>>, %arg4: memref<32x32xf32, #tpu.memory_space<vmem>>, %arg5: memref<1x32xf32, #tpu.memory_space<vmem>>, %arg6: memref<50x32xf32, #tpu.memory_space<vmem>>) attributes {dimension_semantics = [#tpu.dimension_semantics<parallel>], iteration_bounds = array<i64: 1>, scalar_prefetch = 0 : i64, scratch_operands = 0 : i64, tpu.core_type = #tpu.core_type<tc>, window_params = [{transform_indices = @transform_0, window_bounds = array<i64: 50, 32>}, {pipeline_mode = #tpu.pipeline_mode<synchronous>, transform_indices = @transform_1, window_bounds = array<i64: 32, 32>}, {pipeline_mode = #tpu.pipeline_mode<synchronous>, transform_indices = @transform_2, window_bounds = array<i64: 1, 32>}, {pipeline_mode = #tpu.pipeline_mode<synchronous>, transform_indices = @transform_3, window_bounds = array<i64: 32, 32>}, {pipeline_mode = #tpu.pipeline_mode<synchronous>, transform_indices = @transform_4, window_bounds = array<i64: 1, 32>}, {transform_indices = @transform_5, window_bounds = array<i64: 50, 32>}]} {
    %c0 = arith.constant 0 : index
    %c0_0 = arith.constant 0 : index
    %0 = vector.load %arg1[%c0, %c0_0] : memref<50x32xf32, #tpu.memory_space<vmem>>, vector<50x32xf32>
    %c0_1 = arith.constant 0 : index
    %c0_2 = arith.constant 0 : index
    %1 = vector.load %arg2[%c0_1, %c0_2] : memref<32x32xf32, #tpu.memory_space<vmem>>, vector<32x32xf32>
    %cst = arith.constant dense<0.000000e+00> : vector<50x32xf32>
    %2 = tpu.matmul %0, %1, %cst {dimension_numbers = #tpu.dot_dimension_numbers<[1], [0], [0], [1], [0, 0, 1, 1], [], []>} : vector<50x32xf32>, vector<32x32xf32>, vector<50x32xf32> -> vector<50x32xf32>
    %c0_3 = arith.constant 0 : index
    %c0_4 = arith.constant 0 : index
    %3 = vector.load %arg3[%c0_3, %c0_4] : memref<1x32xf32, #tpu.memory_space<vmem>>, vector<1x32xf32>
    %4 = vector.broadcast %3 : vector<1x32xf32> to vector<50x32xf32>
    %5 = arith.addf %2, %4 : vector<50x32xf32>
    %cst_5 = arith.constant 2.000000e-01 : f32
    %6 = vector.broadcast %cst_5 : f32 to vector<50x32xf32>
    %7 = arith.mulf %6, %5 : vector<50x32xf32>
    %8 = arith.maximumf %5, %7 : vector<50x32xf32>
    %c0_6 = arith.constant 0 : index
    %c0_7 = arith.constant 0 : index
    %9 = vector.load %arg4[%c0_6, %c0_7] : memref<32x32xf32, #tpu.memory_space<vmem>>, vector<32x32xf32>
    %cst_8 = arith.constant dense<0.000000e+00> : vector<50x32xf32>
    %10 = tpu.matmul %8, %9, %cst_8 {dimension_numbers = #tpu.dot_dimension_numbers<[1], [0], [0], [1], [0, 0, 1, 1], [], []>} : vector<50x32xf32>, vector<32x32xf32>, vector<50x32xf32> -> vector<50x32xf32>
    %c0_9 = arith.constant 0 : index
    %c0_10 = arith.constant 0 : index
    %11 = vector.load %arg5[%c0_9, %c0_10] : memref<1x32xf32, #tpu.memory_space<vmem>>, vector<1x32xf32>
    %12 = vector.broadcast %11 : vector<1x32xf32> to vector<50x32xf32>
    %13 = arith.addf %10, %12 : vector<50x32xf32>
    %c0_11 = arith.constant 0 : index
    %c0_12 = arith.constant 0 : index
    %14 = vector.load %arg6[%c0_11, %c0_12] : memref<50x32xf32, #tpu.memory_space<vmem>>, vector<50x32xf32>
    tpu.vector_store %arg6[%c0_11, %c0_12], %13 {strides = array<i32>} : memref<50x32xf32, #tpu.memory_space<vmem>>, vector<50x32xf32>,
    return
  }
  func.func @transform_0(%arg0: i32) -> (i32, i32) {
    %c0_i32 = arith.constant 0 : i32
    %c0_i32_0 = arith.constant 0 : i32
    return %arg0, %c0_i32 : i32, i32
  }
  func.func @transform_1(%arg0: i32) -> (i32, i32) {
    %c0_i32 = arith.constant 0 : i32
    %c0_i32_0 = arith.constant 0 : i32
    %c0_i32_1 = arith.constant 0 : i32
    return %c0_i32, %c0_i32_0 : i32, i32
  }
  func.func @transform_2(%arg0: i32) -> (i32, i32) {
    %c0_i32 = arith.constant 0 : i32
    %c0_i32_0 = arith.constant 0 : i32
    %c0_i32_1 = arith.constant 0 : i32
    return %c0_i32, %c0_i32_0 : i32, i32
  }
  func.func @transform_3(%arg0: i32) -> (i32, i32) {
    %c0_i32 = arith.constant 0 : i32
    %c0_i32_0 = arith.constant 0 : i32
    %c0_i32_1 = arith.constant 0 : i32
    return %c0_i32, %c0_i32_0 : i32, i32
  }
  func.func @transform_4(%arg0: i32) -> (i32, i32) {
    %c0_i32 = arith.constant 0 : i32
    %c0_i32_0 = arith.constant 0 : i32
    %c0_i32_1 = arith.constant 0 : i32
    return %c0_i32, %c0_i32_0 : i32, i32
  }
  func.func @transform_5(%arg0: i32) -> (i32, i32) {
    %c0_i32 = arith.constant 0 : i32
    %c0_i32_0 = arith.constant 0 : i32
    return %arg0, %c0_i32 : i32, i32
  }
}

</mosaic_0001>

<llo_original>
// kernel: tpu_custom_call.1
$region0: #{tpu_custom_call.1}
  #allocation0 [shape = 'u32[]', space=smem, size = 0x4, offset = 0x4, fixed_abs, tag = 'smem constant byte address 0x4 - core index']
  #allocation1 [shape = 'u32[144,128]{1,0:T(1,128)}', space=vmem, size = 0x12000, scoped, tag = 'internal scratch']
  %s0 = inlined_call_operand.vmem [shape: f32[50,32], index: 0, kind: input, shape index: {}]
  %s1 = inlined_call_operand.vmem [shape: f32[32,32], index: 1, kind: input, shape index: {}]
  %s2 = inlined_call_operand.vmem [shape: f32[1,32], index: 2, kind: input, shape index: {}]
  %s3 = inlined_call_operand.vmem [shape: f32[32,32], index: 3, kind: input, shape index: {}]
  %s4 = inlined_call_operand.vmem [shape: f32[1,32], index: 4, kind: input, shape index: {}]
  %s5 = inlined_call_operand.vmem [shape: f32[50,32], index: 5, kind: output, shape index: {}]
  %s6 = sld [smem:[#allocation0]]
  $region30: #{tpu_custom_call.1} parent=0
    _
  %s8 = ssub.s32 1, %s6
  %s9 = scalar_select 0, %s8, %s6
  // Predicated region
  $region2: #{tpu_custom_call.1} parent=0 // pred_check
    _
  $region3: #{tpu_custom_call.1} parent=0 // pred_check_branch
    %11 = sbr.rel (0) target = $region5
  $region4: #{tpu_custom_call.1} parent=0 // pred_region
    _
  $region5: #{tpu_custom_call.1} parent=0 // pred_fallthru
    _
  // Predicated region
  $region6: #{tpu_custom_call.1} parent=0 // pred_check
    _
  $region7: #{tpu_custom_call.1} parent=0 // pred_check_branch
    %13 = sbr.rel (0) target = $region9
  $region8: #{tpu_custom_call.1} parent=0 // pred_region
    _
  $region9: #{tpu_custom_call.1} parent=0 // pred_fallthru
    _
  // Predicated region
  $region10: #{tpu_custom_call.1} parent=0 // pred_check
    _
  $region11: #{tpu_custom_call.1} parent=0 // pred_check_branch
    %15 = sbr.rel (0) target = $region13
  $region12: #{tpu_custom_call.1} parent=0 // pred_region
    _
  $region13: #{tpu_custom_call.1} parent=0 // pred_fallthru
    _
  // Predicated region
  $region14: #{tpu_custom_call.1} parent=0 // pred_check
    _
  $region15: #{tpu_custom_call.1} parent=0 // pred_check_branch
    %17 = sbr.rel (0) target = $region17
  $region16: #{tpu_custom_call.1} parent=0 // pred_region
    _
  $region17: #{tpu_custom_call.1} parent=0 // pred_fallthru
    _
  // Predicated region
  $region18: #{tpu_custom_call.1} parent=0 // pred_check
    _
  $region19: #{tpu_custom_call.1} parent=0 // pred_check_branch
    %19 = sbr.rel (0) target = $region21
  $region20: #{tpu_custom_call.1} parent=0 // pred_region
    _
  $region21: #{tpu_custom_call.1} parent=0 // pred_fallthru
    _
  %v20 = vld [vmem:[%s0] sm:$0xff]
  %v21 = vld [vmem:[%s0 + $0x8] sm:$0xff]
  %v22 = vld [vmem:[%s0 + $0x10] sm:$0xff]
  %v23 = vld [vmem:[%s0 + $0x18] sm:$0xff]
  %v24 = vld [vmem:[%s0 + $0x20] sm:$0xff]
  %v25 = vld [vmem:[%s0 + $0x28] sm:$0xff]
  %v26 = vld [vmem:[%s0 + $0x30] sm:$0x3]
  %v27 = vld [vmem:[%s1] sm:$0xff]
  %v28 = vld [vmem:[%s1 + $0x8] sm:$0xff]
  %v29 = vld [vmem:[%s1 + $0x10] sm:$0xff]
  %v30 = vld [vmem:[%s1 + $0x18] sm:$0xff]
  %v31 = vld [vmem:[%s2] sm:$0x1]
  %v33 = vlaneseq
  %v34 = vshrl.u32 %v33, 7
  %v35 = vsub.s32 0, %v34
  %v36 = vrot.slane %v31, %v35
  %vm38 = vcmask 261120
  %v40 = vsel %vm38, %v20, 0
  %v43 = vsel %vm38, %v21, 0
  %v46 = vsel %vm38, %v22, 0
  %v49 = vsel %vm38, %v23, 0
  %v52 = vsel %vm38, %v24, 0
  %v55 = vsel %vm38, %v25, 0
  %v58 = vsel %vm38, %v26, 0
  %60 = vmatprep.subr.mxu0 0.0
  %61 = vmatpush1.msra.mxu0 %v27
  %62 = vmatprep.subr.mxu0 0.0
  %63 = vmatpush1.msra.mxu0 %v28
  %64 = vmatprep.subr.mxu0 0.0
  %65 = vmatpush1.msra.mxu0 %v29
  %66 = vmatprep.subr.mxu0 0.0
  %67 = vmatpush1.msra.mxu0 %v30
  %68 = vmatprep.subr.mxu0 0.0
  %69 = vmatpush1.msra.mxu0 0.0
  %70 = vmatprep.subr.mxu0 0.0
  %71 = vmatpush1.msra.mxu0 0.0
  %72 = vmatprep.subr.mxu0 0.0
  %73 = vmatpush1.msra.mxu0 0.0
  %74 = vmatprep.subr.mxu0 0.0
  %75 = vmatpush1.msra.mxu0 0.0
  %76 = vmatprep.subr.mxu0 0.0
  %77 = vmatpush1.msra.mxu0 0.0
  %78 = vmatprep.subr.mxu0 0.0
  %79 = vmatpush1.msra.mxu0 0.0
  %80 = vmatprep.subr.mxu0 0.0
  %81 = vmatpush1.msra.mxu0 0.0
  %82 = vmatprep.subr.mxu0 0.0
  %83 = vmatpush1.msra.mxu0 0.0
  %84 = vmatprep.subr.mxu0 0.0
  %85 = vmatpush1.msra.mxu0 0.0
  %86 = vmatprep.subr.mxu0 0.0
  %87 = vmatpush1.msra.mxu0 0.0
  %88 = vmatprep.subr.mxu0 0.0
  %89 = vmatpush1.msra.mxu0 0.0
  %90 = vmatprep.subr.mxu0 0.0
  %91 = vmatpush1.msra.mxu0 0.0
  %92 = vmatprep.subr.mxu0 0.0
  %93 = vmatpush1.msra.mxu0 0.0
  %94 = vmatprep.subr.mxu0 0.0
  %95 = vmatpush1.msra.mxu0 0.0
  %96 = vmatprep.subr.mxu0 0.0
  %97 = vmatpush1.msra.mxu0 0.0
  %98 = vmatprep.subr.mxu0 0.0
  %99 = vmatpush1.msra.mxu0 0.0
  %100 = vmatprep.subr.mxu0 0.0
  %101 = vmatpush1.msra.mxu0 0.0
  %102 = vmatprep.subr.mxu0 0.0
  %103 = vmatpush1.msra.mxu0 0.0
  %104 = vmatprep.subr.mxu0 0.0
  %105 = vmatpush1.msra.mxu0 0.0
  %106 = vmatprep.subr.mxu0 0.0
  %107 = vmatpush1.msra.mxu0 0.0
  %108 = vmatprep.subr.mxu0 0.0
  %109 = vmatpush1.msra.mxu0 0.0
  %110 = vmatprep.subr.mxu0 0.0
  %111 = vmatpush1.msra.mxu0 0.0
  %112 = vmatprep.subr.mxu0 0.0
  %113 = vmatpush1.msra.mxu0 0.0
  %114 = vmatprep.subr.mxu0 0.0
  %115 = vmatpush1.msra.mxu0 0.0
  %116 = vmatprep.subr.mxu0 0.0
  %117 = vmatpush1.msra.mxu0 0.0
  %118 = vmatprep.subr.mxu0 0.0
  %119 = vmatpush1.msra.mxu0 0.0
  %120 = vmatprep.subr.mxu0 0.0
  %121 = vmatpush1.msra.mxu0 0.0
  %122 = vmatprep.subr.mxu0 0.0
  %123 = vmatpush1.msra.mxu0 0.0
  %124 = vmatprep.mubr.f32.mxu0 0.0
  %125 = vmatmul.mubr.f32.gmra.mrb[0].mxu0 %v40
  %v126 = vpop.f32.mrb[0].mxu0
  %v127 = vadd.f32 %v36, %v126
  %v128 = vpop.f32.mrb[0].mxu0
  %129 = vmatprep.mubr.f32.mxu0 0.0
  %130 = vmatmul.mubr.f32.gmra.mrb[0].mxu0 %v43
  %v131 = vpop.f32.mrb[0].mxu0
  %v132 = vadd.f32 %v36, %v131
  %v133 = vpop.f32.mrb[0].mxu0
  %134 = vmatprep.mubr.f32.mxu0 0.0
  %135 = vmatmul.mubr.f32.gmra.mrb[0].mxu0 %v46
  %v136 = vpop.f32.mrb[0].mxu0
  %v137 = vadd.f32 %v36, %v136
  %v138 = vpop.f32.mrb[0].mxu0
  %139 = vmatprep.mubr.f32.mxu0 0.0
  %140 = vmatmul.mubr.f32.gmra.mrb[0].mxu0 %v49
  %v141 = vpop.f32.mrb[0].mxu0
  %v142 = vadd.f32 %v36, %v141
  %v143 = vpop.f32.mrb[0].mxu0
  %144 = vmatprep.mubr.f32.mxu0 0.0
  %145 = vmatmul.mubr.f32.gmra.mrb[0].mxu0 %v52
  %v146 = vpop.f32.mrb[0].mxu0
  %v147 = vadd.f32 %v36, %v146
  %v148 = vpop.f32.mrb[0].mxu0
  %149 = vmatprep.mubr.f32.mxu0 0.0
  %150 = vmatmul.mubr.f32.gmra.mrb[0].mxu0 %v55
  %v151 = vpop.f32.mrb[0].mxu0
  %v152 = vadd.f32 %v36, %v151
  %v153 = vpop.f32.mrb[0].mxu0
  %154 = vmatprep.mubr.f32.mxu0 0.0
  %155 = vmatmul.mubr.f32.gmra.mrb[0].mxu0 %v58
  %v156 = vpop.f32.mrb[0].mxu0
  %v157 = vadd.f32 %v36, %v156
  %v158 = vpop.f32.mrb[0].mxu0
  %159 = vdwg.mxu0
  %v160 = vmul.f32 %v127, 0.2
  %v161 = vmul.f32 %v132, 0.2
  %v162 = vmul.f32 %v137, 0.2
  %v163 = vmul.f32 %v142, 0.2
  %v164 = vmul.f32 %v147, 0.2
  %v165 = vmul.f32 %v152, 0.2
  %v166 = vmul.f32 %v157, 0.2
  %v167 = vmax.f32 %v127, %v160
  %v168 = vmax.f32 %v132, %v161
  %v169 = vmax.f32 %v137, %v162
  %v170 = vmax.f32 %v142, %v163
  %v171 = vmax.f32 %v147, %v164
  %v172 = vmax.f32 %v152, %v165
  %v173 = vmax.f32 %v157, %v166
  %v174 = vld [vmem:[%s3] sm:$0xff]
  %v175 = vld [vmem:[%s3 + $0x8] sm:$0xff]
  %v176 = vld [vmem:[%s3 + $0x10] sm:$0xff]
  %v177 = vld [vmem:[%s3 + $0x18] sm:$0xff]
  %v178 = vld [vmem:[%s4] sm:$0x1]
  %v180 = vlaneseq
  %v181 = vshrl.u32 %v180, 7
  %v182 = vsub.s32 0, %v181
  %v183 = vrot.slane %v178, %v182
  %v186 = vsel %vm38, %v167, 0
  %v189 = vsel %vm38, %v168, 0
  %v192 = vsel %vm38, %v169, 0
  %v195 = vsel %vm38, %v170, 0
  %v198 = vsel %vm38, %v171, 0
  %v201 = vsel %vm38, %v172, 0
  %v204 = vsel %vm38, %v173, 0
  %206 = vmatprep.subr.mxu0 0.0
  %207 = vmatpush1.msra.mxu0 %v174
  %208 = vmatprep.subr.mxu0 0.0
  %209 = vmatpush1.msra.mxu0 %v175
  %210 = vmatprep.subr.mxu0 0.0
  %211 = vmatpush1.msra.mxu0 %v176
  %212 = vmatprep.subr.mxu0 0.0
  %213 = vmatpush1.msra.mxu0 %v177
  %214 = vmatprep.subr.mxu0 0.0
  %215 = vmatpush1.msra.mxu0 0.0
  %216 = vmatprep.subr.mxu0 0.0
  %217 = vmatpush1.msra.mxu0 0.0
  %218 = vmatprep.subr.mxu0 0.0
  %219 = vmatpush1.msra.mxu0 0.0
  %220 = vmatprep.subr.mxu0 0.0
  %221 = vmatpush1.msra.mxu0 0.0
  %222 = vmatprep.subr.mxu0 0.0
  %223 = vmatpush1.msra.mxu0 0.0
  %224 = vmatprep.subr.mxu0 0.0
  %225 = vmatpush1.msra.mxu0 0.0
  %226 = vmatprep.subr.mxu0 0.0
  %227 = vmatpush1.msra.mxu0 0.0
  %228 = vmatprep.subr.mxu0 0.0
  %229 = vmatpush1.msra.mxu0 0.0
  %230 = vmatprep.subr.mxu0 0.0
  %231 = vmatpush1.msra.mxu0 0.0
  %232 = vmatprep.subr.mxu0 0.0
  %233 = vmatpush1.msra.mxu0 0.0
  %234 = vmatprep.subr.mxu0 0.0
  %235 = vmatpush1.msra.mxu0 0.0
  %236 = vmatprep.subr.mxu0 0.0
  %237 = vmatpush1.msra.mxu0 0.0
  %238 = vmatprep.subr.mxu0 0.0
  %239 = vmatpush1.msra.mxu0 0.0
  %240 = vmatprep.subr.mxu0 0.0
  %241 = vmatpush1.msra.mxu0 0.0
  %242 = vmatprep.subr.mxu0 0.0
  %243 = vmatpush1.msra.mxu0 0.0
  %244 = vmatprep.subr.mxu0 0.0
  %245 = vmatpush1.msra.mxu0 0.0
  %246 = vmatprep.subr.mxu0 0.0
  %247 = vmatpush1.msra.mxu0 0.0
  %248 = vmatprep.subr.mxu0 0.0
  %249 = vmatpush1.msra.mxu0 0.0
  %250 = vmatprep.subr.mxu0 0.0
  %251 = vmatpush1.msra.mxu0 0.0
  %252 = vmatprep.subr.mxu0 0.0
  %253 = vmatpush1.msra.mxu0 0.0
  %254 = vmatprep.subr.mxu0 0.0
  %255 = vmatpush1.msra.mxu0 0.0
  %256 = vmatprep.subr.mxu0 0.0
  %257 = vmatpush1.msra.mxu0 0.0
  %258 = vmatprep.subr.mxu0 0.0
  %259 = vmatpush1.msra.mxu0 0.0
  %260 = vmatprep.subr.mxu0 0.0
  %261 = vmatpush1.msra.mxu0 0.0
  %262 = vmatprep.subr.mxu0 0.0
  %263 = vmatpush1.msra.mxu0 0.0
  %264 = vmatprep.subr.mxu0 0.0
  %265 = vmatpush1.msra.mxu0 0.0
  %266 = vmatprep.subr.mxu0 0.0
  %267 = vmatpush1.msra.mxu0 0.0
  %268 = vmatprep.subr.mxu0 0.0
  %269 = vmatpush1.msra.mxu0 0.0
  %270 = vmatprep.mubr.f32.mxu0 0.0
  %271 = vmatmul.mubr.f32.gmra.mrb[0].mxu0 %v186
  %v272 = vpop.f32.mrb[0].mxu0
  %v273 = vadd.f32 %v183, %v272
  %v274 = vpop.f32.mrb[0].mxu0
  %275 = vmatprep.mubr.f32.mxu0 0.0
  %276 = vmatmul.mubr.f32.gmra.mrb[0].mxu0 %v189
  %v277 = vpop.f32.mrb[0].mxu0
  %v278 = vadd.f32 %v183, %v277
  %v279 = vpop.f32.mrb[0].mxu0
  %280 = vmatprep.mubr.f32.mxu0 0.0
  %281 = vmatmul.mubr.f32.gmra.mrb[0].mxu0 %v192
  %v282 = vpop.f32.mrb[0].mxu0
  %v283 = vadd.f32 %v183, %v282
  %v284 = vpop.f32.mrb[0].mxu0
  %285 = vmatprep.mubr.f32.mxu0 0.0
  %286 = vmatmul.mubr.f32.gmra.mrb[0].mxu0 %v195
  %v287 = vpop.f32.mrb[0].mxu0
  %v288 = vadd.f32 %v183, %v287
  %v289 = vpop.f32.mrb[0].mxu0
  %290 = vmatprep.mubr.f32.mxu0 0.0
  %291 = vmatmul.mubr.f32.gmra.mrb[0].mxu0 %v198
  %v292 = vpop.f32.mrb[0].mxu0
  %v293 = vadd.f32 %v183, %v292
  %v294 = vpop.f32.mrb[0].mxu0
  %295 = vmatprep.mubr.f32.mxu0 0.0
  %296 = vmatmul.mubr.f32.gmra.mrb[0].mxu0 %v201
  %v297 = vpop.f32.mrb[0].mxu0
  %v298 = vadd.f32 %v183, %v297
  %v299 = vpop.f32.mrb[0].mxu0
  %300 = vmatprep.mubr.f32.mxu0 0.0
  %301 = vmatmul.mubr.f32.gmra.mrb[0].mxu0 %v204
  %v302 = vpop.f32.mrb[0].mxu0
  %v303 = vadd.f32 %v183, %v302
  %v304 = vpop.f32.mrb[0].mxu0
  %305 = vdwg.mxu0
  %306 = vst.msk [vmem:[%s5] sm:$0xff] %vm38, %v273
  %307 = vst.msk [vmem:[%s5 + $0x8] sm:$0xff] %vm38, %v278
  %308 = vst.msk [vmem:[%s5 + $0x10] sm:$0xff] %vm38, %v283
  %309 = vst.msk [vmem:[%s5 + $0x18] sm:$0xff] %vm38, %v288
  %310 = vst.msk [vmem:[%s5 + $0x20] sm:$0xff] %vm38, %v293
  %311 = vst.msk [vmem:[%s5 + $0x28] sm:$0xff] %vm38, %v298
  %vm312 = vcmask 254976
  %313 = vst.msk [vmem:[%s5 + $0x30] sm:$0x3] %vm312, %v303
  // Predicated region
  $region22: #{tpu_custom_call.1} parent=0 // pred_check
    _
  $region23: #{tpu_custom_call.1} parent=0 // pred_check_branch
    %315 = sbr.rel (0) target = $region25
  $region24: #{tpu_custom_call.1} parent=0 // pred_region
    _
  $region25: #{tpu_custom_call.1} parent=0 // pred_fallthru
    _
  // Predicated region
  $region26: #{tpu_custom_call.1} parent=0 // pred_check
    _
  $region27: #{tpu_custom_call.1} parent=0 // pred_check_branch
    %317 = sbr.rel (0) target = $region29
  $region28: #{tpu_custom_call.1} parent=0 // pred_region
    _
  $region29: #{tpu_custom_call.1} parent=0 // pred_fallthru
    _

// kernel: tpu_custom_call.1
$region0: #{tpu_custom_call.1}
  #allocation0 [shape = 'u32[]', space=smem, size = 0x4, offset = 0x4, fixed_abs, tag = 'smem constant byte address 0x4 - core index']
  #allocation1 [shape = 'u32[144,128]{1,0:T(1,128)}', space=vmem, size = 0x12000, scoped, tag = 'internal scratch']
  %s0 = inlined_call_operand.vmem [shape: f32[50,32], index: 0, kind: input, shape index: {}]
  %s1 = inlined_call_operand.vmem [shape: f32[32,32], index: 1, kind: input, shape index: {}]
  %s2 = inlined_call_operand.vmem [shape: f32[1,32], index: 2, kind: input, shape index: {}]
  %s3 = inlined_call_operand.vmem [shape: f32[32,32], index: 3, kind: input, shape index: {}]
  %s4 = inlined_call_operand.vmem [shape: f32[1,32], index: 4, kind: input, shape index: {}]
  %s5 = inlined_call_operand.vmem [shape: f32[50,32], index: 5, kind: output, shape index: {}]
  %s6 = sld [smem:[#allocation0]]
  $region30: #{tpu_custom_call.1} parent=0
    _
  %s8 = ssub.s32 1, %s6
  %s9 = scalar_select 0, %s8, %s6
  // Predicated region
  $region2: #{tpu_custom_call.1} parent=0 // pred_check
    _
  $region3: #{tpu_custom_call.1} parent=0 // pred_check_branch
    %11 = sbr.rel (0) target = $region5
  $region4: #{tpu_custom_call.1} parent=0 // pred_region
    _
  $region5: #{tpu_custom_call.1} parent=0 // pred_fallthru
    _
  // Predicated region
  $region6: #{tpu_custom_call.1} parent=0 // pred_check
    _
  $region7: #{tpu_custom_call.1} parent=0 // pred_check_branch
    %13 = sbr.rel (0) target = $region9
  $region8: #{tpu_custom_call.1} parent=0 // pred_region
    _
  $region9: #{tpu_custom_call.1} parent=0 // pred_fallthru
    _
  // Predicated region
  $region10: #{tpu_custom_call.1} parent=0 // pred_check
    _
  $region11: #{tpu_custom_call.1} parent=0 // pred_check_branch
    %15 = sbr.rel (0) target = $region13
  $region12: #{tpu_custom_call.1} parent=0 // pred_region
    _
  $region13: #{tpu_custom_call.1} parent=0 // pred_fallthru
    _
  // Predicated region
  $region14: #{tpu_custom_call.1} parent=0 // pred_check
    _
  $region15: #{tpu_custom_call.1} parent=0 // pred_check_branch
    %17 = sbr.rel (0) target = $region17
  $region16: #{tpu_custom_call.1} parent=0 // pred_region
    _
  $region17: #{tpu_custom_call.1} parent=0 // pred_fallthru
    _
  // Predicated region
  $region18: #{tpu_custom_call.1} parent=0 // pred_check
    _
  $region19: #{tpu_custom_call.1} parent=0 // pred_check_branch
    %19 = sbr.rel (0) target = $region21
  $region20: #{tpu_custom_call.1} parent=0 // pred_region
    _
  $region21: #{tpu_custom_call.1} parent=0 // pred_fallthru
    _
  %v20 = vld [vmem:[%s0] sm:$0xff]
  %v21 = vld [vmem:[%s0 + $0x8] sm:$0xff]
  %v22 = vld [vmem:[%s0 + $0x10] sm:$0xff]
  %v23 = vld [vmem:[%s0 + $0x18] sm:$0xff]
  %v24 = vld [vmem:[%s0 + $0x20] sm:$0xff]
  %v25 = vld [vmem:[%s0 + $0x28] sm:$0xff]
  %v26 = vld [vmem:[%s0 + $0x30] sm:$0x3]
  %v27 = vld [vmem:[%s1] sm:$0xff]
  %v28 = vld [vmem:[%s1 + $0x8] sm:$0xff]
  %v29 = vld [vmem:[%s1 + $0x10] sm:$0xff]
  %v30 = vld [vmem:[%s1 + $0x18] sm:$0xff]
  %v31 = vld [vmem:[%s2] sm:$0x1]
  %v33 = vlaneseq
  %v34 = vshrl.u32 %v33, 7
  %v35 = vsub.s32 0, %v34
  %v36 = vrot.slane %v31, %v35
  %vm38 = vcmask 261120
  %v40 = vsel %vm38, %v20, 0
  %v43 = vsel %vm38, %v21, 0
  %v46 = vsel %vm38, %v22, 0
  %v49 = vsel %vm38, %v23, 0
  %v52 = vsel %vm38, %v24, 0
  %v55 = vsel %vm38, %v25, 0
  %v58 = vsel %vm38, %v26, 0
  %60 = vmatprep.subr.mxu0 0.0
  %61 = vmatpush1.msra.mxu0 %v27
  %62 = vmatprep.subr.mxu0 0.0
  %63 = vmatpush1.msra.mxu0 %v28
  %64 = vmatprep.subr.mxu0 0.0
  %65 = vmatpush1.msra.mxu0 %v29
  %66 = vmatprep.subr.mxu0 0.0
  %67 = vmatpush1.msra.mxu0 %v30
  %68 = vmatprep.subr.mxu0 0.0
  %69 = vmatpush1.msra.mxu0 0.0
  %70 = vmatprep.subr.mxu0 0.0
  %71 = vmatpush1.msra.mxu0 0.0
  %72 = vmatprep.subr.mxu0 0.0
  %73 = vmatpush1.msra.mxu0 0.0
  %74 = vmatprep.subr.mxu0 0.0
  %75 = vmatpush1.msra.mxu0 0.0
  %76 = vmatprep.subr.mxu0 0.0
  %77 = vmatpush1.msra.mxu0 0.0
  %78 = vmatprep.subr.mxu0 0.0
  %79 = vmatpush1.msra.mxu0 0.0
  %80 = vmatprep.subr.mxu0 0.0
  %81 = vmatpush1.msra.mxu0 0.0
  %82 = vmatprep.subr.mxu0 0.0
  %83 = vmatpush1.msra.mxu0 0.0
  %84 = vmatprep.subr.mxu0 0.0
  %85 = vmatpush1.msra.mxu0 0.0
  %86 = vmatprep.subr.mxu0 0.0
  %87 = vmatpush1.msra.mxu0 0.0
  %88 = vmatprep.subr.mxu0 0.0
  %89 = vmatpush1.msra.mxu0 0.0
  %90 = vmatprep.subr.mxu0 0.0
  %91 = vmatpush1.msra.mxu0 0.0
  %92 = vmatprep.subr.mxu0 0.0
  %93 = vmatpush1.msra.mxu0 0.0
  %94 = vmatprep.subr.mxu0 0.0
  %95 = vmatpush1.msra.mxu0 0.0
  %96 = vmatprep.subr.mxu0 0.0
  %97 = vmatpush1.msra.mxu0 0.0
  %98 = vmatprep.subr.mxu0 0.0
  %99 = vmatpush1.msra.mxu0 0.0
  %100 = vmatprep.subr.mxu0 0.0
  %101 = vmatpush1.msra.mxu0 0.0
  %102 = vmatprep.subr.mxu0 0.0
  %103 = vmatpush1.msra.mxu0 0.0
  %104 = vmatprep.subr.mxu0 0.0
  %105 = vmatpush1.msra.mxu0 0.0
  %106 = vmatprep.subr.mxu0 0.0
  %107 = vmatpush1.msra.mxu0 0.0
  %108 = vmatprep.subr.mxu0 0.0
  %109 = vmatpush1.msra.mxu0 0.0
  %110 = vmatprep.subr.mxu0 0.0
  %111 = vmatpush1.msra.mxu0 0.0
  %112 = vmatprep.subr.mxu0 0.0
  %113 = vmatpush1.msra.mxu0 0.0
  %114 = vmatprep.subr.mxu0 0.0
  %115 = vmatpush1.msra.mxu0 0.0
  %116 = vmatprep.subr.mxu0 0.0
  %117 = vmatpush1.msra.mxu0 0.0
  %118 = vmatprep.subr.mxu0 0.0
  %119 = vmatpush1.msra.mxu0 0.0
  %120 = vmatprep.subr.mxu0 0.0
  %121 = vmatpush1.msra.mxu0 0.0
  %122 = vmatprep.subr.mxu0 0.0
  %123 = vmatpush1.msra.mxu0 0.0
  %124 = vmatprep.mubr.f32.mxu0 0.0
  %125 = vmatmul.mubr.f32.gmra.mrb[0].mxu0 %v40
  %v126 = vpop.f32.mrb[0].mxu0
  %v127 = vadd.f32 %v36, %v126
  %v128 = vpop.f32.mrb[0].mxu0
  %129 = vmatprep.mubr.f32.mxu0 0.0
  %130 = vmatmul.mubr.f32.gmra.mrb[0].mxu0 %v43
  %v131 = vpop.f32.mrb[0].mxu0
  %v132 = vadd.f32 %v36, %v131
  %v133 = vpop.f32.mrb[0].mxu0
  %134 = vmatprep.mubr.f32.mxu0 0.0
  %135 = vmatmul.mubr.f32.gmra.mrb[0].mxu0 %v46
  %v136 = vpop.f32.mrb[0].mxu0
  %v137 = vadd.f32 %v36, %v136
  %v138 = vpop.f32.mrb[0].mxu0
  %139 = vmatprep.mubr.f32.mxu0 0.0
  %140 = vmatmul.mubr.f32.gmra.mrb[0].mxu0 %v49
  %v141 = vpop.f32.mrb[0].mxu0
  %v142 = vadd.f32 %v36, %v141
  %v143 = vpop.f32.mrb[0].mxu0
  %144 = vmatprep.mubr.f32.mxu0 0.0
  %145 = vmatmul.mubr.f32.gmra.mrb[0].mxu0 %v52
  %v146 = vpop.f32.mrb[0].mxu0
  %v147 = vadd.f32 %v36, %v146
  %v148 = vpop.f32.mrb[0].mxu0
  %149 = vmatprep.mubr.f32.mxu0 0.0
  %150 = vmatmul.mubr.f32.gmra.mrb[0].mxu0 %v55
  %v151 = vpop.f32.mrb[0].mxu0
  %v152 = vadd.f32 %v36, %v151
  %v153 = vpop.f32.mrb[0].mxu0
  %154 = vmatprep.mubr.f32.mxu0 0.0
  %155 = vmatmul.mubr.f32.gmra.mrb[0].mxu0 %v58
  %v156 = vpop.f32.mrb[0].mxu0
  %v157 = vadd.f32 %v36, %v156
  %v158 = vpop.f32.mrb[0].mxu0
  %159 = vdwg.mxu0
  %v160 = vmul.f32 %v127, 0.2
  %v161 = vmul.f32 %v132, 0.2
  %v162 = vmul.f32 %v137, 0.2
  %v163 = vmul.f32 %v142, 0.2
  %v164 = vmul.f32 %v147, 0.2
  %v165 = vmul.f32 %v152, 0.2
  %v166 = vmul.f32 %v157, 0.2
  %v167 = vmax.f32 %v127, %v160
  %v168 = vmax.f32 %v132, %v161
  %v169 = vmax.f32 %v137, %v162
  %v170 = vmax.f32 %v142, %v163
  %v171 = vmax.f32 %v147, %v164
  %v172 = vmax.f32 %v152, %v165
  %v173 = vmax.f32 %v157, %v166
  %v174 = vld [vmem:[%s3] sm:$0xff]
  %v175 = vld [vmem:[%s3 + $0x8] sm:$0xff]
  %v176 = vld [vmem:[%s3 + $0x10] sm:$0xff]
  %v177 = vld [vmem:[%s3 + $0x18] sm:$0xff]
  %v178 = vld [vmem:[%s4] sm:$0x1]
  %v180 = vlaneseq
  %v181 = vshrl.u32 %v180, 7
  %v182 = vsub.s32 0, %v181
  %v183 = vrot.slane %v178, %v182
  %v186 = vsel %vm38, %v167, 0
  %v189 = vsel %vm38, %v168, 0
  %v192 = vsel %vm38, %v169, 0
  %v195 = vsel %vm38, %v170, 0
  %v198 = vsel %vm38, %v171, 0
  %v201 = vsel %vm38, %v172, 0
  %v204 = vsel %vm38, %v173, 0
  %206 = vmatprep.subr.mxu0 0.0
  %207 = vmatpush1.msra.mxu0 %v174
  %208 = vmatprep.subr.mxu0 0.0
  %209 = vmatpush1.msra.mxu0 %v175
  %210 = vmatprep.subr.mxu0 0.0
  %211 = vmatpush1.msra.mxu0 %v176
  %212 = vmatprep.subr.mxu0 0.0
  %213 = vmatpush1.msra.mxu0 %v177
  %214 = vmatprep.subr.mxu0 0.0
  %215 = vmatpush1.msra.mxu0 0.0
  %216 = vmatprep.subr.mxu0 0.0
  %217 = vmatpush1.msra.mxu0 0.0
  %218 = vmatprep.subr.mxu0 0.0
  %219 = vmatpush1.msra.mxu0 0.0
  %220 = vmatprep.subr.mxu0 0.0
  %221 = vmatpush1.msra.mxu0 0.0
  %222 = vmatprep.subr.mxu0 0.0
  %223 = vmatpush1.msra.mxu0 0.0
  %224 = vmatprep.subr.mxu0 0.0
  %225 = vmatpush1.msra.mxu0 0.0
  %226 = vmatprep.subr.mxu0 0.0
  %227 = vmatpush1.msra.mxu0 0.0
  %228 = vmatprep.subr.mxu0 0.0
  %229 = vmatpush1.msra.mxu0 0.0
  %230 = vmatprep.subr.mxu0 0.0
  %231 = vmatpush1.msra.mxu0 0.0
  %232 = vmatprep.subr.mxu0 0.0
  %233 = vmatpush1.msra.mxu0 0.0
  %234 = vmatprep.subr.mxu0 0.0
  %235 = vmatpush1.msra.mxu0 0.0
  %236 = vmatprep.subr.mxu0 0.0
  %237 = vmatpush1.msra.mxu0 0.0
  %238 = vmatprep.subr.mxu0 0.0
  %239 = vmatpush1.msra.mxu0 0.0
  %240 = vmatprep.subr.mxu0 0.0
  %241 = vmatpush1.msra.mxu0 0.0
  %242 = vmatprep.subr.mxu0 0.0
  %243 = vmatpush1.msra.mxu0 0.0
  %244 = vmatprep.subr.mxu0 0.0
  %245 = vmatpush1.msra.mxu0 0.0
  %246 = vmatprep.subr.mxu0 0.0
  %247 = vmatpush1.msra.mxu0 0.0
  %248 = vmatprep.subr.mxu0 0.0
  %249 = vmatpush1.msra.mxu0 0.0
  %250 = vmatprep.subr.mxu0 0.0
  %251 = vmatpush1.msra.mxu0 0.0
  %252 = vmatprep.subr.mxu0 0.0
  %253 = vmatpush1.msra.mxu0 0.0
  %254 = vmatprep.subr.mxu0 0.0
  %255 = vmatpush1.msra.mxu0 0.0
  %256 = vmatprep.subr.mxu0 0.0
  %257 = vmatpush1.msra.mxu0 0.0
  %258 = vmatprep.subr.mxu0 0.0
  %259 = vmatpush1.msra.mxu0 0.0
  %260 = vmatprep.subr.mxu0 0.0
  %261 = vmatpush1.msra.mxu0 0.0
  %262 = vmatprep.subr.mxu0 0.0
  %263 = vmatpush1.msra.mxu0 0.0
  %264 = vmatprep.subr.mxu0 0.0
  %265 = vmatpush1.msra.mxu0 0.0
  %266 = vmatprep.subr.mxu0 0.0
  %267 = vmatpush1.msra.mxu0 0.0
  %268 = vmatprep.subr.mxu0 0.0
  %269 = vmatpush1.msra.mxu0 0.0
  %270 = vmatprep.mubr.f32.mxu0 0.0
  %271 = vmatmul.mubr.f32.gmra.mrb[0].mxu0 %v186
  %v272 = vpop.f32.mrb[0].mxu0
  %v273 = vadd.f32 %v183, %v272
  %v274 = vpop.f32.mrb[0].mxu0
  %275 = vmatprep.mubr.f32.mxu0 0.0
  %276 = vmatmul.mubr.f32.gmra.mrb[0].mxu0 %v189
  %v277 = vpop.f32.mrb[0].mxu0
  %v278 = vadd.f32 %v183, %v277
  %v279 = vpop.f32.mrb[0].mxu0
  %280 = vmatprep.mubr.f32.mxu0 0.0
  %281 = vmatmul.mubr.f32.gmra.mrb[0].mxu0 %v192
  %v282 = vpop.f32.mrb[0].mxu0
  %v283 = vadd.f32 %v183, %v282
  %v284 = vpop.f32.mrb[0].mxu0
  %285 = vmatprep.mubr.f32.mxu0 0.0
  %286 = vmatmul.mubr.f32.gmra.mrb[0].mxu0 %v195
  %v287 = vpop.f32.mrb[0].mxu0
  %v288 = vadd.f32 %v183, %v287
  %v289 = vpop.f32.mrb[0].mxu0
  %290 = vmatprep.mubr.f32.mxu0 0.0
  %291 = vmatmul.mubr.f32.gmra.mrb[0].mxu0 %v198
  %v292 = vpop.f32.mrb[0].mxu0
  %v293 = vadd.f32 %v183, %v292
  %v294 = vpop.f32.mrb[0].mxu0
  %295 = vmatprep.mubr.f32.mxu0 0.0
  %296 = vmatmul.mubr.f32.gmra.mrb[0].mxu0 %v201
  %v297 = vpop.f32.mrb[0].mxu0
  %v298 = vadd.f32 %v183, %v297
  %v299 = vpop.f32.mrb[0].mxu0
  %300 = vmatprep.mubr.f32.mxu0 0.0
  %301 = vmatmul.mubr.f32.gmra.mrb[0].mxu0 %v204
  %v302 = vpop.f32.mrb[0].mxu0
  %v303 = vadd.f32 %v183, %v302
  %v304 = vpop.f32.mrb[0].mxu0
  %305 = vdwg.mxu0
  %306 = vst.msk [vmem:[%s5] sm:$0xff] %vm38, %v273
  %307 = vst.msk [vmem:[%s5 + $0x8] sm:$0xff] %vm38, %v278
  %308 = vst.msk [vmem:[%s5 + $0x10] sm:$0xff] %vm38, %v283
  %309 = vst.msk [vmem:[%s5 + $0x18] sm:$0xff] %vm38, %v288
  %310 = vst.msk [vmem:[%s5 + $0x20] sm:$0xff] %vm38, %v293
  %311 = vst.msk [vmem:[%s5 + $0x28] sm:$0xff] %vm38, %v298
  %vm312 = vcmask 254976
  %313 = vst.msk [vmem:[%s5 + $0x30] sm:$0x3] %vm312, %v303
  // Predicated region
  $region22: #{tpu_custom_call.1} parent=0 // pred_check
    _
  $region23: #{tpu_custom_call.1} parent=0 // pred_check_branch
    %315 = sbr.rel (0) target = $region25
  $region24: #{tpu_custom_call.1} parent=0 // pred_region
    _
  $region25: #{tpu_custom_call.1} parent=0 // pred_fallthru
    _
  // Predicated region
  $region26: #{tpu_custom_call.1} parent=0 // pred_check
    _
  $region27: #{tpu_custom_call.1} parent=0 // pred_check_branch
    %317 = sbr.rel (0) target = $region29
  $region28: #{tpu_custom_call.1} parent=0 // pred_region
    _
  $region29: #{tpu_custom_call.1} parent=0 // pred_fallthru
    _

</llo_original>
